<compile_context>
chip_gen: v7x
topology: tpu7x:2x2x1
jax: 0.10.0
libtpu: 0.0.40
codegen_flags: <defaults>
</compile_context>

<pallas_src>
import functools

import jax
import jax.numpy as jnp
from jax.experimental import pallas as pl
from jax.experimental.pallas import tpu as pltpu

_LANE = 128
_SUBLANE = 8


def _round_up(x, m):
    return ((x + m - 1) // m) * m


def _pad2d(a, rows, cols):
    r, c = a.shape
    if r == rows and c == cols:
        return a
    return jnp.pad(a, ((0, rows - r), (0, cols - c)))


def _query_tpu():
    """One-time hardware query: per-core VMEM capacity and TensorCores per chip.

    Conservative fallbacks (64 MiB, 1 TC) if the query is unavailable."""
    vmem_cap = 64 << 20
    num_tc = 1
    try:
        info = pltpu.get_tpu_info()
        vmem_cap = int(getattr(info, "vmem_capacity_bytes", vmem_cap))
        for name in ("num_cores", "tensorcores_per_chip", "num_tensorcores"):
            v = getattr(info, name, None)
            if v:
                num_tc = int(v)
                break
    except Exception:
        pass
    return vmem_cap, max(1, num_tc)


_VMEM_CAP_BYTES, _NUM_TENSORCORES = _query_tpu()
_VMEM_BUDGET_BYTES = int(0.85 * _VMEM_CAP_BYTES)   # headroom for compiler scratch


def _choose_tile_b(batch, requested, num_tc):
    """As large a batch tile as requested/possible; only force >= num_tc grid
    steps when the chip actually has multiple TensorCores."""
    b8 = _round_up(max(batch, 1), _SUBLANE)
    tile = min(_round_up(max(requested, _SUBLANE), _SUBLANE), b8)
    if num_tc > 1 and b8 // tile < num_tc and b8 >= num_tc * _SUBLANE:
        tile = _round_up(-(-b8 // num_tc), _SUBLANE)
    return tile


def _vmem_footprint_bytes(tile_b, dims_pad, compute_itemsize, x_itemsize, out_itemsize):
    """Double-buffered x/out tiles + resident (double-buffered) params + f32
    intermediate headroom.  dims_pad[0] is the TRUE input width (unpadded)."""
    n_layers = len(dims_pad) - 1
    w_bytes = sum(dims_pad[i] * dims_pad[i + 1] for i in range(n_layers)) * compute_itemsize * 2
    b_bytes = sum(dims_pad[1:]) * 4 * 2
    x_bytes = 2 * tile_b * dims_pad[0] * x_itemsize
    o_bytes = 2 * tile_b * dims_pad[-1] * out_itemsize
    h_bytes = 2 * tile_b * max(dims_pad) * 4        # f32 intermediates / spill room
    return w_bytes + b_bytes + x_bytes + o_bytes + h_bytes


def _apply_activation(name, x):
    if name == "relu":
        return jnp.maximum(x, 0.0)
    if name == "sigmoid":
        return jax.nn.sigmoid(x)
    if name == "tanh":
        return jnp.tanh(x)
    if name is None:
        return x
    raise ValueError("Invalid activation function")


def _dnn_kernel(num_layers, compute_dtype, activation, *refs):
    """Fused MLP on one batch tile held in VMEM.

    refs = (x_ref, w0_ref, b0_ref, w1_ref, b1_ref, ..., o_ref)
    x arrives in its stored dtype and is cast to the compute dtype in-kernel;
    W is stored in the compute dtype (MXU inputs); accumulation, bias-add and
    activation are f32; the last layer has no activation (Identity)."""
    x_ref = refs[0]
    o_ref = refs[-1]
    h = x_ref[...].astype(compute_dtype)
    for i in range(num_layers):
        w_ref = refs[1 + 2 * i]
        b_ref = refs[2 + 2 * i]
        acc = jnp.dot(h, w_ref[...], preferred_element_type=jnp.float32)
        acc = acc + b_ref[...]                      # bias is stored f32
        if i != num_layers - 1:
            acc = _apply_activation(activation, acc)
            h = acc.astype(compute_dtype)           # back to MXU dtype
        else:
            h = acc                                 # keep f32 for the store
        # Dropout(p=0.0) == Identity -> nothing to do.
    o_ref[...] = h.astype(o_ref.dtype)


def _build_dnn_call(num_layers, b_pad, tile_b, dims_pad, compute_dtype, out_dtype,
                    x_dtype, activation):
    kernel = functools.partial(_dnn_kernel, num_layers, compute_dtype, activation)

    in_specs = [pl.BlockSpec((tile_b, dims_pad[0]), lambda i: (i, 0))]
    for li in range(num_layers):
        # Resident params: constant index_map (same block every grid step).
        in_specs.append(pl.BlockSpec((dims_pad[li], dims_pad[li + 1]), lambda i: (0, 0)))
        in_specs.append(pl.BlockSpec((1, dims_pad[li + 1]), lambda i: (0, 0)))
    out_spec = pl.BlockSpec((tile_b, dims_pad[-1]), lambda i: (i, 0))

    compute_is = jnp.dtype(compute_dtype).itemsize
    out_is = jnp.dtype(out_dtype).itemsize
    x_is = jnp.dtype(x_dtype).itemsize

    footprint = _vmem_footprint_bytes(tile_b, dims_pad, compute_is, x_is, out_is)
    vmem_limit = int(min(_VMEM_BUDGET_BYTES, max(32 << 20, 2 * footprint)))

    flops = 2 * b_pad * sum(dims_pad[i] * dims_pad[i + 1] for i in range(num_layers))
    transc = b_pad * sum(dims_pad[1:-1]) if activation in ("sigmoid", "tanh") else 0
    bytes_accessed = (b_pad * dims_pad[0] * x_is
                      + sum(dims_pad[i] * dims_pad[i + 1] for i in range(num_layers)) * compute_is
                      + sum(dims_pad[1:]) * 4
                      + b_pad * dims_pad[-1] * out_is)

    return pl.pallas_call(
        kernel,
        out_shape=jax.ShapeDtypeStruct((b_pad, dims_pad[-1]), out_dtype),
        grid_spec=pltpu.PrefetchScalarGridSpec(
            num_scalar_prefetch=0,
            grid=(b_pad // tile_b,),
            in_specs=in_specs,
            out_specs=out_spec,
        ),
        compiler_params=pltpu.CompilerParams(
            dimension_semantics=("parallel",),
            vmem_limit_bytes=vmem_limit),
        cost_estimate=pl.CostEstimate(flops=flops, transcendentals=transc,
                                      bytes_accessed=bytes_accessed),
    )


def prepare_dnn_params(weights_t, biases, *, compute_dtype=jnp.bfloat16):
    """Pad/cast parameters ONCE (hoisted out of the per-call path).

    weights_t: list of (dim_prev, dim_out) -- already transposed from PyTorch (out, in)
    biases:    list of (dim_out,) or (1, dim_out)
    Returns (params, dims, dims_pad) where dims_pad[0] is the TRUE input width."""
    dims = [weights_t[0].shape[0]] + [w.shape[1] for w in weights_t]
    dims_pad = [dims[0]] + [_round_up(d, _LANE) for d in dims[1:]]
    params = []
    for li, (w, b) in enumerate(zip(weights_t, biases)):
        wp = _pad2d(w, dims_pad[li], dims_pad[li + 1]).astype(compute_dtype)
        bp = _pad2d(jnp.reshape(b, (1, -1)), 1, dims_pad[li + 1]).astype(jnp.float32)
        params += [wp, bp]
    return params, dims, dims_pad


def dnn_forward(x, prepared, *, activation="relu", tile_b=2048,
                compute_dtype=jnp.bfloat16, out_dtype=jnp.float32):
    """Run the fused DNN forward pass.  jit-compatible (no host sync, no probes).

    x:        (B, dim_in) -- passed with its true feature width (no wrapper pad/cast)
    prepared: output of prepare_dnn_params (must match compute_dtype)."""
    params, dims, dims_pad = prepared
    num_layers = len(dims) - 1
    B, dim_in = x.shape
    assert dim_in == dims[0], "x feature dim does not match prepared parameters"
    dim_out = dims[-1]

    tile = _choose_tile_b(B, tile_b, _NUM_TENSORCORES)

    # Shrink the tile until the footprint fits the generation-aware VMEM budget.
    compute_is = jnp.dtype(compute_dtype).itemsize
    out_is = jnp.dtype(out_dtype).itemsize
    x_is = jnp.dtype(x.dtype).itemsize
    while tile > _SUBLANE and _vmem_footprint_bytes(
            tile, dims_pad, compute_is, x_is, out_is) > _VMEM_BUDGET_BYTES:
        tile = _round_up(max(tile // 2, _SUBLANE), _SUBLANE)

    b_pad = _round_up(B, tile)
    x_in = x if b_pad == B else jnp.pad(x, ((0, b_pad - B), (0, 0)))

    call = _build_dnn_call(num_layers, b_pad, tile, dims_pad, compute_dtype,
                           out_dtype, x.dtype, activation)
    out_pad = call(x_in, *params)
    return out_pad[:B, :dim_out]


def dnn_reference(x, weights_t, biases, *, activation="relu",
                  compute_dtype=jnp.float32):
    """Pure-JAX reference with the same precision policy as the kernel."""
    n = len(weights_t)
    h = x.astype(compute_dtype)
    for i, (w, b) in enumerate(zip(weights_t, biases)):
        acc = jnp.dot(h.astype(compute_dtype), w.astype(compute_dtype),
                      preferred_element_type=jnp.float32)
        acc = acc + jnp.reshape(b, (1, -1)).astype(jnp.float32)
        if i != n - 1:
            acc = _apply_activation(activation, acc)
            h = acc.astype(compute_dtype)
        else:
            h = acc
    return h.astype(jnp.float32)


if __name__ == "__main__":
    # DNNArgs(dim_in=64, dim_hiddens=[128, 64, 32], bias=True, dropout=0.0,
    #         activation='relu')
    dim_in = 64
    dim_hiddens = [128, 64, 32]
    batch = 256

    key = jax.random.PRNGKey(0)
    k_x, *k_params = jax.random.split(key, 1 + 2 * len(dim_hiddens))

    x = jax.random.normal(k_x, (batch, dim_in), dtype=jnp.float32)

    # Deterministic parameter init (PyTorch shapes: W (dim_out, dim_in), b (dim_out,)).
    weights_t, biases = [], []
    d_prev = dim_in
    for i, d_out in enumerate(dim_hiddens):
        kw, kb = k_params[2 * i], k_params[2 * i + 1]
        bound = 1.0 / (d_prev ** 0.5)
        w = jax.random.uniform(kw, (d_out, d_prev), jnp.float32, -bound, bound)
        b = jax.random.uniform(kb, (d_out,), jnp.float32, -bound, bound)
        weights_t.append(jnp.transpose(w))          # (d_prev, d_out) for x @ W
        biases.append(b)
        d_prev = d_out

    # Parameters are padded/cast ONCE, outside the per-call path.
    prep_f32 = prepare_dnn_params(weights_t, biases, compute_dtype=jnp.float32)
    prep_bf16 = prepare_dnn_params(weights_t, biases, compute_dtype=jnp.bfloat16)

    ref_f32 = dnn_reference(x, weights_t, biases, compute_dtype=jnp.float32)

    # 1) Exact-parity f32 path vs the f32 reference (matches PyTorch semantics).
    out_f32 = jax.block_until_ready(
        dnn_forward(x, prep_f32, compute_dtype=jnp.float32))
    assert out_f32.shape == (batch, dim_hiddens[-1])
    assert jnp.allclose(out_f32, ref_f32, atol=1e-4, rtol=1e-4), "f32 mismatch vs reference"

    # 2) Default perf path: bf16 MXU inputs with f32 accumulation, checked against
    #    a matching-precision reference and loosely against the f32 semantics.
    out_bf16 = jax.block_until_ready(dnn_forward(x, prep_bf16))
    ref_bf16 = dnn_reference(x, weights_t, biases, compute_dtype=jnp.bfloat16)
    assert out_bf16.shape == (batch, dim_hiddens[-1])
    assert jnp.allclose(out_bf16, ref_bf16, atol=2e-3, rtol=2e-3), "bf16 mismatch vs bf16 reference"
    assert jnp.allclose(out_bf16, ref_f32, atol=5e-2, rtol=5e-2), "bf16 drifted from f32 semantics"

    # 3) Ragged batch (exercises the row-only padding path).
    x_odd = x[:100]
    out_odd = jax.block_until_ready(
        dnn_forward(x_odd, prep_f32, compute_dtype=jnp.float32))
    ref_odd = dnn_reference(x_odd, weights_t, biases, compute_dtype=jnp.float32)
    assert out_odd.shape == (100, dim_hiddens[-1])
    assert jnp.allclose(out_odd, ref_odd, atol=1e-4, rtol=1e-4), "ragged-batch mismatch"

    print("KERNEL_OK")
</pallas_src>

<mosaic_0001>
module attributes {stable_mosaic.version = 11 : i64} {
  func.func @_dnn_kernel(%arg0: i32, %arg1: memref<256x64xf32, #tpu.memory_space<vmem>>, %arg2: memref<64x128xf32, #tpu.memory_space<vmem>>, %arg3: memref<1x128xf32, #tpu.memory_space<vmem>>, %arg4: memref<128x128xf32, #tpu.memory_space<vmem>>, %arg5: memref<1x128xf32, #tpu.memory_space<vmem>>, %arg6: memref<128x128xf32, #tpu.memory_space<vmem>>, %arg7: memref<1x128xf32, #tpu.memory_space<vmem>>, %arg8: memref<256x128xf32, #tpu.memory_space<vmem>>) attributes {dimension_semantics = [#tpu.dimension_semantics<parallel>], iteration_bounds = array<i64: 1>, scalar_prefetch = 0 : i64, scratch_operands = 0 : i64, tpu.core_type = #tpu.core_type<tc>, window_params = [{transform_indices = @transform_0, window_bounds = array<i64: 256, 64>}, {pipeline_mode = #tpu.pipeline_mode<synchronous>, transform_indices = @transform_1, window_bounds = array<i64: 64, 128>}, {pipeline_mode = #tpu.pipeline_mode<synchronous>, transform_indices = @transform_2, window_bounds = array<i64: 1, 128>}, {pipeline_mode = #tpu.pipeline_mode<synchronous>, transform_indices = @transform_3, window_bounds = array<i64: 128, 128>}, {pipeline_mode = #tpu.pipeline_mode<synchronous>, transform_indices = @transform_4, window_bounds = array<i64: 1, 128>}, {pipeline_mode = #tpu.pipeline_mode<synchronous>, transform_indices = @transform_5, window_bounds = array<i64: 128, 128>}, {pipeline_mode = #tpu.pipeline_mode<synchronous>, transform_indices = @transform_6, window_bounds = array<i64: 1, 128>}, {transform_indices = @transform_7, window_bounds = array<i64: 256, 128>}]} {
    %c0 = arith.constant 0 : index
    %c0_0 = arith.constant 0 : index
    %0 = vector.load %arg1[%c0, %c0_0] : memref<256x64xf32, #tpu.memory_space<vmem>>, vector<256x64xf32>
    %c0_1 = arith.constant 0 : index
    %c0_2 = arith.constant 0 : index
    %1 = vector.load %arg2[%c0_1, %c0_2] : memref<64x128xf32, #tpu.memory_space<vmem>>, vector<64x128xf32>
    %cst = arith.constant dense<0.000000e+00> : vector<256x128xf32>
    %2 = tpu.matmul %0, %1, %cst {dimension_numbers = #tpu.dot_dimension_numbers<[1], [0], [0], [1], [0, 0, 1, 1], [], []>} : vector<256x64xf32>, vector<64x128xf32>, vector<256x128xf32> -> vector<256x128xf32>
    %c0_3 = arith.constant 0 : index
    %c0_4 = arith.constant 0 : index
    %3 = vector.load %arg3[%c0_3, %c0_4] : memref<1x128xf32, #tpu.memory_space<vmem>>, vector<1x128xf32>
    %4 = vector.broadcast %3 : vector<1x128xf32> to vector<256x128xf32>
    %5 = arith.addf %2, %4 : vector<256x128xf32>
    %cst_5 = arith.constant 0.000000e+00 : f32
    %6 = vector.broadcast %cst_5 : f32 to vector<256x128xf32>
    %7 = arith.maximumf %5, %6 : vector<256x128xf32>
    %c0_6 = arith.constant 0 : index
    %c0_7 = arith.constant 0 : index
    %8 = vector.load %arg4[%c0_6, %c0_7] : memref<128x128xf32, #tpu.memory_space<vmem>>, vector<128x128xf32>
    %cst_8 = arith.constant dense<0.000000e+00> : vector<256x128xf32>
    %9 = tpu.matmul %7, %8, %cst_8 {dimension_numbers = #tpu.dot_dimension_numbers<[1], [0], [0], [1], [0, 0, 1, 1], [], []>} : vector<256x128xf32>, vector<128x128xf32>, vector<256x128xf32> -> vector<256x128xf32>
    %c0_9 = arith.constant 0 : index
    %c0_10 = arith.constant 0 : index
    %10 = vector.load %arg5[%c0_9, %c0_10] : memref<1x128xf32, #tpu.memory_space<vmem>>, vector<1x128xf32>
    %11 = vector.broadcast %10 : vector<1x128xf32> to vector<256x128xf32>
    %12 = arith.addf %9, %11 : vector<256x128xf32>
    %cst_11 = arith.constant 0.000000e+00 : f32
    %13 = vector.broadcast %cst_11 : f32 to vector<256x128xf32>
    %14 = arith.maximumf %12, %13 : vector<256x128xf32>
    %c0_12 = arith.constant 0 : index
    %c0_13 = arith.constant 0 : index
    %15 = vector.load %arg6[%c0_12, %c0_13] : memref<128x128xf32, #tpu.memory_space<vmem>>, vector<128x128xf32>
    %cst_14 = arith.constant dense<0.000000e+00> : vector<256x128xf32>
    %16 = tpu.matmul %14, %15, %cst_14 {dimension_numbers = #tpu.dot_dimension_numbers<[1], [0], [0], [1], [0, 0, 1, 1], [], []>} : vector<256x128xf32>, vector<128x128xf32>, vector<256x128xf32> -> vector<256x128xf32>
    %c0_15 = arith.constant 0 : index
    %c0_16 = arith.constant 0 : index
    %17 = vector.load %arg7[%c0_15, %c0_16] : memref<1x128xf32, #tpu.memory_space<vmem>>, vector<1x128xf32>
    %18 = vector.broadcast %17 : vector<1x128xf32> to vector<256x128xf32>
    %19 = arith.addf %16, %18 : vector<256x128xf32>
    %c0_17 = arith.constant 0 : index
    %c0_18 = arith.constant 0 : index
    %20 = vector.load %arg8[%c0_17, %c0_18] : memref<256x128xf32, #tpu.memory_space<vmem>>, vector<256x128xf32>
    tpu.vector_store %arg8[%c0_17, %c0_18], %19 {strides = array<i32>} : memref<256x128xf32, #tpu.memory_space<vmem>>, vector<256x128xf32>,
    return
  }
  func.func @transform_0(%arg0: i32) -> (i32, i32) {
    %c0_i32 = arith.constant 0 : i32
    %c0_i32_0 = arith.constant 0 : i32
    return %arg0, %c0_i32 : i32, i32
  }
  func.func @transform_1(%arg0: i32) -> (i32, i32) {
    %c0_i32 = arith.constant 0 : i32
    %c0_i32_0 = arith.constant 0 : i32
    %c0_i32_1 = arith.constant 0 : i32
    return %c0_i32, %c0_i32_0 : i32, i32
  }
  func.func @transform_2(%arg0: i32) -> (i32, i32) {
    %c0_i32 = arith.constant 0 : i32
    %c0_i32_0 = arith.constant 0 : i32
    %c0_i32_1 = arith.constant 0 : i32
    return %c0_i32, %c0_i32_0 : i32, i32
  }
  func.func @transform_3(%arg0: i32) -> (i32, i32) {
    %c0_i32 = arith.constant 0 : i32
    %c0_i32_0 = arith.constant 0 : i32
    %c0_i32_1 = arith.constant 0 : i32
    return %c0_i32, %c0_i32_0 : i32, i32
  }
  func.func @transform_4(%arg0: i32) -> (i32, i32) {
    %c0_i32 = arith.constant 0 : i32
    %c0_i32_0 = arith.constant 0 : i32
    %c0_i32_1 = arith.constant 0 : i32
    return %c0_i32, %c0_i32_0 : i32, i32
  }
  func.func @transform_5(%arg0: i32) -> (i32, i32) {
    %c0_i32 = arith.constant 0 : i32
    %c0_i32_0 = arith.constant 0 : i32
    %c0_i32_1 = arith.constant 0 : i32
    return %c0_i32, %c0_i32_0 : i32, i32
  }
  func.func @transform_6(%arg0: i32) -> (i32, i32) {
    %c0_i32 = arith.constant 0 : i32
    %c0_i32_0 = arith.constant 0 : i32
    %c0_i32_1 = arith.constant 0 : i32
    return %c0_i32, %c0_i32_0 : i32, i32
  }
  func.func @transform_7(%arg0: i32) -> (i32, i32) {
    %c0_i32 = arith.constant 0 : i32
    %c0_i32_0 = arith.constant 0 : i32
    return %arg0, %c0_i32 : i32, i32
  }
}

</mosaic_0001>

<llo_original>
// kernel: tpu_custom_call.1
$region0: #{tpu_custom_call.1}
  #allocation0 [shape = 'u32[]', space=smem, size = 0x4, offset = 0x4, fixed_abs, tag = 'smem constant byte address 0x4 - core index']
  #allocation1 [shape = 'u32[144,128]{1,0:T(1,128)}', space=vmem, size = 0x12000, scoped, tag = 'internal scratch']
  %s0 = inlined_call_operand.vmem [shape: f32[256,64], index: 0, kind: input, shape index: {}]
  %s1 = inlined_call_operand.vmem [shape: f32[64,128], index: 1, kind: input, shape index: {}]
  %s2 = inlined_call_operand.vmem [shape: f32[1,128], index: 2, kind: input, shape index: {}]
  %s3 = inlined_call_operand.vmem [shape: f32[128,128], index: 3, kind: input, shape index: {}]
  %s4 = inlined_call_operand.vmem [shape: f32[1,128], index: 4, kind: input, shape index: {}]
  %s5 = inlined_call_operand.vmem [shape: f32[128,128], index: 5, kind: input, shape index: {}]
  %s6 = inlined_call_operand.vmem [shape: f32[1,128], index: 6, kind: input, shape index: {}]
  %s7 = inlined_call_operand.hbm [shape: f32[256,128], index: 7, kind: output, shape index: {}]
  %s8 = sld [smem:[#allocation0]]
  $region38: #{tpu_custom_call.1} parent=0
    _
  %s10 = ssub.s32 1, %s8
  %s11 = scalar_select 0, %s10, %s8
  $region1: #{tpu_custom_call.1} parent=0
    #allocation2 [shape = 'u8[131072]{0}', space=vmem, size = 0x20000, scoped, tag = 'output window, operand 0, single buffered']
    #allocation3 [shape = 's32[1]{0}', space=sflag, size = 0x4, scoped, tag = 'scoped memory for tpu_custom_call.1']
    %12 = vsyncpa [#allocation3], 0
    // Predicated region
    $region2: #{tpu_custom_call.1} parent=1 // pred_check
      _
    $region3: #{tpu_custom_call.1} parent=1 // pred_check_branch
      %14 = sbr.rel (0) target = $region5
    $region4: #{tpu_custom_call.1} parent=1 // pred_region
      _
    $region5: #{tpu_custom_call.1} parent=1 // pred_fallthru
      _
    // Predicated region
    $region6: #{tpu_custom_call.1} parent=1 // pred_check
      _
    $region7: #{tpu_custom_call.1} parent=1 // pred_check_branch
      %16 = sbr.rel (0) target = $region9
    $region8: #{tpu_custom_call.1} parent=1 // pred_region
      _
    $region9: #{tpu_custom_call.1} parent=1 // pred_fallthru
      _
    // Predicated region
    $region10: #{tpu_custom_call.1} parent=1 // pred_check
      _
    $region11: #{tpu_custom_call.1} parent=1 // pred_check_branch
      %18 = sbr.rel (0) target = $region13
    $region12: #{tpu_custom_call.1} parent=1 // pred_region
      _
    $region13: #{tpu_custom_call.1} parent=1 // pred_fallthru
      _
    // Predicated region
    $region14: #{tpu_custom_call.1} parent=1 // pred_check
      _
    $region15: #{tpu_custom_call.1} parent=1 // pred_check_branch
      %20 = sbr.rel (0) target = $region17
    $region16: #{tpu_custom_call.1} parent=1 // pred_region
      _
    $region17: #{tpu_custom_call.1} parent=1 // pred_fallthru
      _
    // Predicated region
    $region18: #{tpu_custom_call.1} parent=1 // pred_check
      _
    $region19: #{tpu_custom_call.1} parent=1 // pred_check_branch
      %22 = sbr.rel (0) target = $region21
    $region20: #{tpu_custom_call.1} parent=1 // pred_region
      _
    $region21: #{tpu_custom_call.1} parent=1 // pred_fallthru
      _
    // Predicated region
    $region22: #{tpu_custom_call.1} parent=1 // pred_check
      _
    $region23: #{tpu_custom_call.1} parent=1 // pred_check_branch
      %24 = sbr.rel (0) target = $region25
    $region24: #{tpu_custom_call.1} parent=1 // pred_region
      _
    $region25: #{tpu_custom_call.1} parent=1 // pred_fallthru
      _
    // Predicated region
    $region26: #{tpu_custom_call.1} parent=1 // pred_check
      _
    $region27: #{tpu_custom_call.1} parent=1 // pred_check_branch
      %26 = sbr.rel (0) target = $region29
    $region28: #{tpu_custom_call.1} parent=1 // pred_region
      _
    $region29: #{tpu_custom_call.1} parent=1 // pred_fallthru
      _
    %v27 = vld [vmem:[%s0] sm:$0xff]
    %v28 = vld [vmem:[%s0 + $0x8] sm:$0xff]
    %v29 = vld [vmem:[%s0 + $0x10] sm:$0xff]
    %v30 = vld [vmem:[%s0 + $0x18] sm:$0xff]
    %v31 = vld [vmem:[%s0 + $0x20] sm:$0xff]
    %v32 = vld [vmem:[%s0 + $0x28] sm:$0xff]
    %v33 = vld [vmem:[%s0 + $0x30] sm:$0xff]
    %v34 = vld [vmem:[%s0 + $0x38] sm:$0xff]
    %v35 = vld [vmem:[%s0 + $0x40] sm:$0xff]
    %v36 = vld [vmem:[%s0 + $0x48] sm:$0xff]
    %v37 = vld [vmem:[%s0 + $0x50] sm:$0xff]
    %v38 = vld [vmem:[%s0 + $0x58] sm:$0xff]
    %v39 = vld [vmem:[%s0 + $0x60] sm:$0xff]
    %v40 = vld [vmem:[%s0 + $0x68] sm:$0xff]
    %v41 = vld [vmem:[%s0 + $0x70] sm:$0xff]
    %v42 = vld [vmem:[%s0 + $0x78] sm:$0xff]
    %v43 = vld [vmem:[%s0 + $0x80] sm:$0xff]
    %v44 = vld [vmem:[%s0 + $0x88] sm:$0xff]
    %v45 = vld [vmem:[%s0 + $0x90] sm:$0xff]
    %v46 = vld [vmem:[%s0 + $0x98] sm:$0xff]
    %v47 = vld [vmem:[%s0 + $0xa0] sm:$0xff]
    %v48 = vld [vmem:[%s0 + $0xa8] sm:$0xff]
    %v49 = vld [vmem:[%s0 + $0xb0] sm:$0xff]
    %v50 = vld [vmem:[%s0 + $0xb8] sm:$0xff]
    %v51 = vld [vmem:[%s0 + $0xc0] sm:$0xff]
    %v52 = vld [vmem:[%s0 + $0xc8] sm:$0xff]
    %v53 = vld [vmem:[%s0 + $0xd0] sm:$0xff]
    %v54 = vld [vmem:[%s0 + $0xd8] sm:$0xff]
    %v55 = vld [vmem:[%s0 + $0xe0] sm:$0xff]
    %v56 = vld [vmem:[%s0 + $0xe8] sm:$0xff]
    %v57 = vld [vmem:[%s0 + $0xf0] sm:$0xff]
    %v58 = vld [vmem:[%s0 + $0xf8] sm:$0xff]
    %v59 = vld [vmem:[%s1] sm:$0xff]
    %v60 = vld [vmem:[%s1 + $0x8] sm:$0xff]
    %v61 = vld [vmem:[%s1 + $0x10] sm:$0xff]
    %v62 = vld [vmem:[%s1 + $0x18] sm:$0xff]
    %v63 = vld [vmem:[%s1 + $0x20] sm:$0xff]
    %v64 = vld [vmem:[%s1 + $0x28] sm:$0xff]
    %v65 = vld [vmem:[%s1 + $0x30] sm:$0xff]
    %v66 = vld [vmem:[%s1 + $0x38] sm:$0xff]
    %v67 = vld [vmem:[%s2] sm:$0x1]
    %v69 = vlaneseq
    %v70 = vshrl.u32 %v69, 7
    %v71 = vsub.s32 0, %v70
    %v72 = vrot.slane %v67, %v71
    %vm74 = vcmask 523264
    %v76 = vsel %vm74, %v27, 0
    %v79 = vsel %vm74, %v28, 0
    %v82 = vsel %vm74, %v29, 0
    %v85 = vsel %vm74, %v30, 0
    %v88 = vsel %vm74, %v31, 0
    %v91 = vsel %vm74, %v32, 0
    %v94 = vsel %vm74, %v33, 0
    %v97 = vsel %vm74, %v34, 0
    %v100 = vsel %vm74, %v35, 0
    %v103 = vsel %vm74, %v36, 0
    %v106 = vsel %vm74, %v37, 0
    %v109 = vsel %vm74, %v38, 0
    %v112 = vsel %vm74, %v39, 0
    %v115 = vsel %vm74, %v40, 0
    %v118 = vsel %vm74, %v41, 0
    %v121 = vsel %vm74, %v42, 0
    %v124 = vsel %vm74, %v43, 0
    %v127 = vsel %vm74, %v44, 0
    %v130 = vsel %vm74, %v45, 0
    %v133 = vsel %vm74, %v46, 0
    %v136 = vsel %vm74, %v47, 0
    %v139 = vsel %vm74, %v48, 0
    %v142 = vsel %vm74, %v49, 0
    %v145 = vsel %vm74, %v50, 0
    %v148 = vsel %vm74, %v51, 0
    %v151 = vsel %vm74, %v52, 0
    %v154 = vsel %vm74, %v53, 0
    %v157 = vsel %vm74, %v54, 0
    %v160 = vsel %vm74, %v55, 0
    %v163 = vsel %vm74, %v56, 0
    %v166 = vsel %vm74, %v57, 0
    %v169 = vsel %vm74, %v58, 0
    %171 = vmatprep.subr.mxu0 0.0
    %172 = vmatpush1.msra.mxu0 %v59
    %173 = vmatprep.subr.mxu0 0.0
    %174 = vmatpush1.msra.mxu0 %v60
    %175 = vmatprep.subr.mxu0 0.0
    %176 = vmatpush1.msra.mxu0 %v61
    %177 = vmatprep.subr.mxu0 0.0
    %178 = vmatpush1.msra.mxu0 %v62
    %179 = vmatprep.subr.mxu0 0.0
    %180 = vmatpush1.msra.mxu0 %v63
    %181 = vmatprep.subr.mxu0 0.0
    %182 = vmatpush1.msra.mxu0 %v64
    %183 = vmatprep.subr.mxu0 0.0
    %184 = vmatpush1.msra.mxu0 %v65
    %185 = vmatprep.subr.mxu0 0.0
    %186 = vmatpush1.msra.mxu0 %v66
    %187 = vmatprep.subr.mxu0 0.0
    %188 = vmatpush1.msra.mxu0 0.0
    %189 = vmatprep.subr.mxu0 0.0
    %190 = vmatpush1.msra.mxu0 0.0
    %191 = vmatprep.subr.mxu0 0.0
    %192 = vmatpush1.msra.mxu0 0.0
    %193 = vmatprep.subr.mxu0 0.0
    %194 = vmatpush1.msra.mxu0 0.0
    %195 = vmatprep.subr.mxu0 0.0
    %196 = vmatpush1.msra.mxu0 0.0
    %197 = vmatprep.subr.mxu0 0.0
    %198 = vmatpush1.msra.mxu0 0.0
    %199 = vmatprep.subr.mxu0 0.0
    %200 = vmatpush1.msra.mxu0 0.0
    %201 = vmatprep.subr.mxu0 0.0
    %202 = vmatpush1.msra.mxu0 0.0
    %203 = vmatprep.subr.mxu0 0.0
    %204 = vmatpush1.msra.mxu0 0.0
    %205 = vmatprep.subr.mxu0 0.0
    %206 = vmatpush1.msra.mxu0 0.0
    %207 = vmatprep.subr.mxu0 0.0
    %208 = vmatpush1.msra.mxu0 0.0
    %209 = vmatprep.subr.mxu0 0.0
    %210 = vmatpush1.msra.mxu0 0.0
    %211 = vmatprep.subr.mxu0 0.0
    %212 = vmatpush1.msra.mxu0 0.0
    %213 = vmatprep.subr.mxu0 0.0
    %214 = vmatpush1.msra.mxu0 0.0
    %215 = vmatprep.subr.mxu0 0.0
    %216 = vmatpush1.msra.mxu0 0.0
    %217 = vmatprep.subr.mxu0 0.0
    %218 = vmatpush1.msra.mxu0 0.0
    %219 = vmatprep.subr.mxu0 0.0
    %220 = vmatpush1.msra.mxu0 0.0
    %221 = vmatprep.subr.mxu0 0.0
    %222 = vmatpush1.msra.mxu0 0.0
    %223 = vmatprep.subr.mxu0 0.0
    %224 = vmatpush1.msra.mxu0 0.0
    %225 = vmatprep.subr.mxu0 0.0
    %226 = vmatpush1.msra.mxu0 0.0
    %227 = vmatprep.subr.mxu0 0.0
    %228 = vmatpush1.msra.mxu0 0.0
    %229 = vmatprep.subr.mxu0 0.0
    %230 = vmatpush1.msra.mxu0 0.0
    %231 = vmatprep.subr.mxu0 0.0
    %232 = vmatpush1.msra.mxu0 0.0
    %233 = vmatprep.subr.mxu0 0.0
    %234 = vmatpush1.msra.mxu0 0.0
    %235 = vmatprep.mubr.f32.mxu0 0.0
    %236 = vmatmul.mubr.f32.gmra.mrb[0].mxu0 %v76
    %v237 = vpop.f32.mrb[0].mxu0
    %v238 = vadd.f32 %v72, %v237
    %v239 = vpop.f32.mrb[0].mxu0
    %240 = vmatprep.mubr.f32.mxu0 0.0
    %241 = vmatmul.mubr.f32.gmra.mrb[0].mxu0 %v79
    %v242 = vpop.f32.mrb[0].mxu0
    %v243 = vadd.f32 %v72, %v242
    %v244 = vpop.f32.mrb[0].mxu0
    %245 = vmatprep.mubr.f32.mxu0 0.0
    %246 = vmatmul.mubr.f32.gmra.mrb[0].mxu0 %v82
    %v247 = vpop.f32.mrb[0].mxu0
    %v248 = vadd.f32 %v72, %v247
    %v249 = vpop.f32.mrb[0].mxu0
    %250 = vmatprep.mubr.f32.mxu0 0.0
    %251 = vmatmul.mubr.f32.gmra.mrb[0].mxu0 %v85
    %v252 = vpop.f32.mrb[0].mxu0
    %v253 = vadd.f32 %v72, %v252
    %v254 = vpop.f32.mrb[0].mxu0
    %255 = vmatprep.mubr.f32.mxu0 0.0
    %256 = vmatmul.mubr.f32.gmra.mrb[0].mxu0 %v88
    %v257 = vpop.f32.mrb[0].mxu0
    %v258 = vadd.f32 %v72, %v257
    %v259 = vpop.f32.mrb[0].mxu0
    %260 = vmatprep.mubr.f32.mxu0 0.0
    %261 = vmatmul.mubr.f32.gmra.mrb[0].mxu0 %v91
    %v262 = vpop.f32.mrb[0].mxu0
    %v263 = vadd.f32 %v72, %v262
    %v264 = vpop.f32.mrb[0].mxu0
    %265 = vmatprep.mubr.f32.mxu0 0.0
    %266 = vmatmul.mubr.f32.gmra.mrb[0].mxu0 %v94
    %v267 = vpop.f32.mrb[0].mxu0
    %v268 = vadd.f32 %v72, %v267
    %v269 = vpop.f32.mrb[0].mxu0
    %270 = vmatprep.mubr.f32.mxu0 0.0
    %271 = vmatmul.mubr.f32.gmra.mrb[0].mxu0 %v97
    %v272 = vpop.f32.mrb[0].mxu0
    %v273 = vadd.f32 %v72, %v272
    %v274 = vpop.f32.mrb[0].mxu0
    %275 = vmatprep.mubr.f32.mxu0 0.0
    %276 = vmatmul.mubr.f32.gmra.mrb[0].mxu0 %v100
    %v277 = vpop.f32.mrb[0].mxu0
    %v278 = vadd.f32 %v72, %v277
    %v279 = vpop.f32.mrb[0].mxu0
    %280 = vmatprep.mubr.f32.mxu0 0.0
    %281 = vmatmul.mubr.f32.gmra.mrb[0].mxu0 %v103
    %v282 = vpop.f32.mrb[0].mxu0
    %v283 = vadd.f32 %v72, %v282
    %v284 = vpop.f32.mrb[0].mxu0
    %285 = vmatprep.mubr.f32.mxu0 0.0
    %286 = vmatmul.mubr.f32.gmra.mrb[0].mxu0 %v106
    %v287 = vpop.f32.mrb[0].mxu0
    %v288 = vadd.f32 %v72, %v287
    %v289 = vpop.f32.mrb[0].mxu0
    %290 = vmatprep.mubr.f32.mxu0 0.0
    %291 = vmatmul.mubr.f32.gmra.mrb[0].mxu0 %v109
    %v292 = vpop.f32.mrb[0].mxu0
    %v293 = vadd.f32 %v72, %v292
    %v294 = vpop.f32.mrb[0].mxu0
    %295 = vmatprep.mubr.f32.mxu0 0.0
    %296 = vmatmul.mubr.f32.gmra.mrb[0].mxu0 %v112
    %v297 = vpop.f32.mrb[0].mxu0
    %v298 = vadd.f32 %v72, %v297
    %v299 = vpop.f32.mrb[0].mxu0
    %300 = vmatprep.mubr.f32.mxu0 0.0
    %301 = vmatmul.mubr.f32.gmra.mrb[0].mxu0 %v115
    %v302 = vpop.f32.mrb[0].mxu0
    %v303 = vadd.f32 %v72, %v302
    %v304 = vpop.f32.mrb[0].mxu0
    %305 = vmatprep.mubr.f32.mxu0 0.0
    %306 = vmatmul.mubr.f32.gmra.mrb[0].mxu0 %v118
    %v307 = vpop.f32.mrb[0].mxu0
    %v308 = vadd.f32 %v72, %v307
    %v309 = vpop.f32.mrb[0].mxu0
    %310 = vmatprep.mubr.f32.mxu0 0.0
    %311 = vmatmul.mubr.f32.gmra.mrb[0].mxu0 %v121
    %v312 = vpop.f32.mrb[0].mxu0
    %v313 = vadd.f32 %v72, %v312
    %v314 = vpop.f32.mrb[0].mxu0
    %315 = vmatprep.mubr.f32.mxu0 0.0
    %316 = vmatmul.mubr.f32.gmra.mrb[0].mxu0 %v124
    %v317 = vpop.f32.mrb[0].mxu0
    %v318 = vadd.f32 %v72, %v317
    %v319 = vpop.f32.mrb[0].mxu0
    %320 = vmatprep.mubr.f32.mxu0 0.0
    %321 = vmatmul.mubr.f32.gmra.mrb[0].mxu0 %v127
    %v322 = vpop.f32.mrb[0].mxu0
    %v323 = vadd.f32 %v72, %v322
    %v324 = vpop.f32.mrb[0].mxu0
    %325 = vmatprep.mubr.f32.mxu0 0.0
    %326 = vmatmul.mubr.f32.gmra.mrb[0].mxu0 %v130
    %v327 = vpop.f32.mrb[0].mxu0
    %v328 = vadd.f32 %v72, %v327
    %v329 = vpop.f32.mrb[0].mxu0
    %330 = vmatprep.mubr.f32.mxu0 0.0
    %331 = vmatmul.mubr.f32.gmra.mrb[0].mxu0 %v133
    %v332 = vpop.f32.mrb[0].mxu0
    %v333 = vadd.f32 %v72, %v332
    %v334 = vpop.f32.mrb[0].mxu0
    %335 = vmatprep.mubr.f32.mxu0 0.0
    %336 = vmatmul.mubr.f32.gmra.mrb[0].mxu0 %v136
    %v337 = vpop.f32.mrb[0].mxu0
    %v338 = vadd.f32 %v72, %v337
    %v339 = vpop.f32.mrb[0].mxu0
    %340 = vmatprep.mubr.f32.mxu0 0.0
    %341 = vmatmul.mubr.f32.gmra.mrb[0].mxu0 %v139
    %v342 = vpop.f32.mrb[0].mxu0
    %v343 = vadd.f32 %v72, %v342
    %v344 = vpop.f32.mrb[0].mxu0
    %345 = vmatprep.mubr.f32.mxu0 0.0
    %346 = vmatmul.mubr.f32.gmra.mrb[0].mxu0 %v142
    %v347 = vpop.f32.mrb[0].mxu0
    %v348 = vadd.f32 %v72, %v347
    %v349 = vpop.f32.mrb[0].mxu0
    %350 = vmatprep.mubr.f32.mxu0 0.0
    %351 = vmatmul.mubr.f32.gmra.mrb[0].mxu0 %v145
    %v352 = vpop.f32.mrb[0].mxu0
    %v353 = vadd.f32 %v72, %v352
    %v354 = vpop.f32.mrb[0].mxu0
    %355 = vmatprep.mubr.f32.mxu0 0.0
    %356 = vmatmul.mubr.f32.gmra.mrb[0].mxu0 %v148
    %v357 = vpop.f32.mrb[0].mxu0
    %v358 = vadd.f32 %v72, %v357
    %v359 = vpop.f32.mrb[0].mxu0
    %360 = vmatprep.mubr.f32.mxu0 0.0
    %361 = vmatmul.mubr.f32.gmra.mrb[0].mxu0 %v151
    %v362 = vpop.f32.mrb[0].mxu0
    %v363 = vadd.f32 %v72, %v362
    %v364 = vpop.f32.mrb[0].mxu0
    %365 = vmatprep.mubr.f32.mxu0 0.0
    %366 = vmatmul.mubr.f32.gmra.mrb[0].mxu0 %v154
    %v367 = vpop.f32.mrb[0].mxu0
    %v368 = vadd.f32 %v72, %v367
    %v369 = vpop.f32.mrb[0].mxu0
    %370 = vmatprep.mubr.f32.mxu0 0.0
    %371 = vmatmul.mubr.f32.gmra.mrb[0].mxu0 %v157
    %v372 = vpop.f32.mrb[0].mxu0
    %v373 = vadd.f32 %v72, %v372
    %v374 = vpop.f32.mrb[0].mxu0
    %375 = vmatprep.mubr.f32.mxu0 0.0
    %376 = vmatmul.mubr.f32.gmra.mrb[0].mxu0 %v160
    %v377 = vpop.f32.mrb[0].mxu0
    %v378 = vadd.f32 %v72, %v377
    %v379 = vpop.f32.mrb[0].mxu0
    %380 = vmatprep.mubr.f32.mxu0 0.0
    %381 = vmatmul.mubr.f32.gmra.mrb[0].mxu0 %v163
    %v382 = vpop.f32.mrb[0].mxu0
    %v383 = vadd.f32 %v72, %v382
    %v384 = vpop.f32.mrb[0].mxu0
    %385 = vmatprep.mubr.f32.mxu0 0.0
    %386 = vmatmul.mubr.f32.gmra.mrb[0].mxu0 %v166
    %v387 = vpop.f32.mrb[0].mxu0
    %v388 = vadd.f32 %v72, %v387
    %v389 = vpop.f32.mrb[0].mxu0
    %390 = vmatprep.mubr.f32.mxu0 0.0
    %391 = vmatmul.mubr.f32.gmra.mrb[0].mxu0 %v169
    %v392 = vpop.f32.mrb[0].mxu0
    %v393 = vadd.f32 %v72, %v392
    %v394 = vpop.f32.mrb[0].mxu0
    %395 = vdwg.mxu0
    %v396 = vmax.f32 %v238, 0.0
    %v397 = vmax.f32 %v243, 0.0
    %v398 = vmax.f32 %v248, 0.0
    %v399 = vmax.f32 %v253, 0.0
    %v400 = vmax.f32 %v258, 0.0
    %v401 = vmax.f32 %v263, 0.0
    %v402 = vmax.f32 %v268, 0.0
    %v403 = vmax.f32 %v273, 0.0
    %v404 = vmax.f32 %v278, 0.0
    %v405 = vmax.f32 %v283, 0.0
    %v406 = vmax.f32 %v288, 0.0
    %v407 = vmax.f32 %v293, 0.0
    %v408 = vmax.f32 %v298, 0.0
    %v409 = vmax.f32 %v303, 0.0
    %v410 = vmax.f32 %v308, 0.0
    %v411 = vmax.f32 %v313, 0.0
    %v412 = vmax.f32 %v318, 0.0
    %v413 = vmax.f32 %v323, 0.0
    %v414 = vmax.f32 %v328, 0.0
    %v415 = vmax.f32 %v333, 0.0
    %v416 = vmax.f32 %v338, 0.0
    %v417 = vmax.f32 %v343, 0.0
    %v418 = vmax.f32 %v348, 0.0
    %v419 = vmax.f32 %v353, 0.0
    %v420 = vmax.f32 %v358, 0.0
    %v421 = vmax.f32 %v363, 0.0
    %v422 = vmax.f32 %v368, 0.0
    %v423 = vmax.f32 %v373, 0.0
    %v424 = vmax.f32 %v378, 0.0
    %v425 = vmax.f32 %v383, 0.0
    %v426 = vmax.f32 %v388, 0.0
    %v427 = vmax.f32 %v393, 0.0
    %v428 = vld [vmem:[%s3] sm:$0xff]
    %v429 = vld [vmem:[%s3 + $0x8] sm:$0xff]
    %v430 = vld [vmem:[%s3 + $0x10] sm:$0xff]
    %v431 = vld [vmem:[%s3 + $0x18] sm:$0xff]
    %v432 = vld [vmem:[%s3 + $0x20] sm:$0xff]
    %v433 = vld [vmem:[%s3 + $0x28] sm:$0xff]
    %v434 = vld [vmem:[%s3 + $0x30] sm:$0xff]
    %v435 = vld [vmem:[%s3 + $0x38] sm:$0xff]
    %v436 = vld [vmem:[%s3 + $0x40] sm:$0xff]
    %v437 = vld [vmem:[%s3 + $0x48] sm:$0xff]
    %v438 = vld [vmem:[%s3 + $0x50] sm:$0xff]
    %v439 = vld [vmem:[%s3 + $0x58] sm:$0xff]
    %v440 = vld [vmem:[%s3 + $0x60] sm:$0xff]
    %v441 = vld [vmem:[%s3 + $0x68] sm:$0xff]
    %v442 = vld [vmem:[%s3 + $0x70] sm:$0xff]
    %v443 = vld [vmem:[%s3 + $0x78] sm:$0xff]
    %v444 = vld [vmem:[%s4] sm:$0x1]
    %v446 = vlaneseq
    %v447 = vshrl.u32 %v446, 7
    %v448 = vsub.s32 0, %v447
    %v449 = vrot.slane %v444, %v448
    %451 = vmatprep.subr.mxu0 0.0
    %452 = vmatpush1.msra.mxu0 %v428
    %453 = vmatprep.subr.mxu0 0.0
    %454 = vmatpush1.msra.mxu0 %v429
    %455 = vmatprep.subr.mxu0 0.0
    %456 = vmatpush1.msra.mxu0 %v430
    %457 = vmatprep.subr.mxu0 0.0
    %458 = vmatpush1.msra.mxu0 %v431
    %459 = vmatprep.subr.mxu0 0.0
    %460 = vmatpush1.msra.mxu0 %v432
    %461 = vmatprep.subr.mxu0 0.0
    %462 = vmatpush1.msra.mxu0 %v433
    %463 = vmatprep.subr.mxu0 0.0
    %464 = vmatpush1.msra.mxu0 %v434
    %465 = vmatprep.subr.mxu0 0.0
    %466 = vmatpush1.msra.mxu0 %v435
    %467 = vmatprep.subr.mxu0 0.0
    %468 = vmatpush1.msra.mxu0 %v436
    %469 = vmatprep.subr.mxu0 0.0
    %470 = vmatpush1.msra.mxu0 %v437
    %471 = vmatprep.subr.mxu0 0.0
    %472 = vmatpush1.msra.mxu0 %v438
    %473 = vmatprep.subr.mxu0 0.0
    %474 = vmatpush1.msra.mxu0 %v439
    %475 = vmatprep.subr.mxu0 0.0
    %476 = vmatpush1.msra.mxu0 %v440
    %477 = vmatprep.subr.mxu0 0.0
    %478 = vmatpush1.msra.mxu0 %v441
    %479 = vmatprep.subr.mxu0 0.0
    %480 = vmatpush1.msra.mxu0 %v442
    %481 = vmatprep.subr.mxu0 0.0
    %482 = vmatpush1.msra.mxu0 %v443
    %483 = vmatprep.subr.mxu0 0.0
    %484 = vmatpush1.msra.mxu0 0.0
    %485 = vmatprep.subr.mxu0 0.0
    %486 = vmatpush1.msra.mxu0 0.0
    %487 = vmatprep.subr.mxu0 0.0
    %488 = vmatpush1.msra.mxu0 0.0
    %489 = vmatprep.subr.mxu0 0.0
    %490 = vmatpush1.msra.mxu0 0.0
    %491 = vmatprep.subr.mxu0 0.0
    %492 = vmatpush1.msra.mxu0 0.0
    %493 = vmatprep.subr.mxu0 0.0
    %494 = vmatpush1.msra.mxu0 0.0
    %495 = vmatprep.subr.mxu0 0.0
    %496 = vmatpush1.msra.mxu0 0.0
    %497 = vmatprep.subr.mxu0 0.0
    %498 = vmatpush1.msra.mxu0 0.0
    %499 = vmatprep.subr.mxu0 0.0
    %500 = vmatpush1.msra.mxu0 0.0
    %501 = vmatprep.subr.mxu0 0.0
    %502 = vmatpush1.msra.mxu0 0.0
    %503 = vmatprep.subr.mxu0 0.0
    %504 = vmatpush1.msra.mxu0 0.0
    %505 = vmatprep.subr.mxu0 0.0
    %506 = vmatpush1.msra.mxu0 0.0
    %507 = vmatprep.subr.mxu0 0.0
    %508 = vmatpush1.msra.mxu0 0.0
    %509 = vmatprep.subr.mxu0 0.0
    %510 = vmatpush1.msra.mxu0 0.0
    %511 = vmatprep.subr.mxu0 0.0
    %512 = vmatpush1.msra.mxu0 0.0
    %513 = vmatprep.subr.mxu0 0.0
    %514 = vmatpush1.msra.mxu0 0.0
    %515 = vmatprep.mubr.f32.mxu0 0.0
    %516 = vmatmul.mubr.f32.gmra.mrb[0].mxu0 %v396
    %v517 = vpop.f32.mrb[0].mxu0
    %v518 = vadd.f32 %v449, %v517
    %v519 = vpop.f32.mrb[0].mxu0
    %520 = vmatprep.mubr.f32.mxu0 0.0
    %521 = vmatmul.mubr.f32.gmra.mrb[0].mxu0 %v397
    %v522 = vpop.f32.mrb[0].mxu0
    %v523 = vadd.f32 %v449, %v522
    %v524 = vpop.f32.mrb[0].mxu0
    %525 = vmatprep.mubr.f32.mxu0 0.0
    %526 = vmatmul.mubr.f32.gmra.mrb[0].mxu0 %v398
    %v527 = vpop.f32.mrb[0].mxu0
    %v528 = vadd.f32 %v449, %v527
    %v529 = vpop.f32.mrb[0].mxu0
    %530 = vmatprep.mubr.f32.mxu0 0.0
    %531 = vmatmul.mubr.f32.gmra.mrb[0].mxu0 %v399
    %v532 = vpop.f32.mrb[0].mxu0
    %v533 = vadd.f32 %v449, %v532
    %v534 = vpop.f32.mrb[0].mxu0
    %535 = vmatprep.mubr.f32.mxu0 0.0
    %536 = vmatmul.mubr.f32.gmra.mrb[0].mxu0 %v400
    %v537 = vpop.f32.mrb[0].mxu0
    %v538 = vadd.f32 %v449, %v537
    %v539 = vpop.f32.mrb[0].mxu0
    %540 = vmatprep.mubr.f32.mxu0 0.0
    %541 = vmatmul.mubr.f32.gmra.mrb[0].mxu0 %v401
    %v542 = vpop.f32.mrb[0].mxu0
    %v543 = vadd.f32 %v449, %v542
    %v544 = vpop.f32.mrb[0].mxu0
    %545 = vmatprep.mubr.f32.mxu0 0.0
    %546 = vmatmul.mubr.f32.gmra.mrb[0].mxu0 %v402
    %v547 = vpop.f32.mrb[0].mxu0
    %v548 = vadd.f32 %v449, %v547
    %v549 = vpop.f32.mrb[0].mxu0
    %550 = vmatprep.mubr.f32.mxu0 0.0
    %551 = vmatmul.mubr.f32.gmra.mrb[0].mxu0 %v403
    %v552 = vpop.f32.mrb[0].mxu0
    %v553 = vadd.f32 %v449, %v552
    %v554 = vpop.f32.mrb[0].mxu0
    %555 = vmatprep.mubr.f32.mxu0 0.0
    %556 = vmatmul.mubr.f32.gmra.mrb[0].mxu0 %v404
    %v557 = vpop.f32.mrb[0].mxu0
    %v558 = vadd.f32 %v449, %v557
    %v559 = vpop.f32.mrb[0].mxu0
    %560 = vmatprep.mubr.f32.mxu0 0.0
    %561 = vmatmul.mubr.f32.gmra.mrb[0].mxu0 %v405
    %v562 = vpop.f32.mrb[0].mxu0
    %v563 = vadd.f32 %v449, %v562
    %v564 = vpop.f32.mrb[0].mxu0
    %565 = vmatprep.mubr.f32.mxu0 0.0
    %566 = vmatmul.mubr.f32.gmra.mrb[0].mxu0 %v406
    %v567 = vpop.f32.mrb[0].mxu0
    %v568 = vadd.f32 %v449, %v567
    %v569 = vpop.f32.mrb[0].mxu0
    %570 = vmatprep.mubr.f32.mxu0 0.0
    %571 = vmatmul.mubr.f32.gmra.mrb[0].mxu0 %v407
    %v572 = vpop.f32.mrb[0].mxu0
    %v573 = vadd.f32 %v449, %v572
    %v574 = vpop.f32.mrb[0].mxu0
    %575 = vmatprep.mubr.f32.mxu0 0.0
    %576 = vmatmul.mubr.f32.gmra.mrb[0].mxu0 %v408
    %v577 = vpop.f32.mrb[0].mxu0
    %v578 = vadd.f32 %v449, %v577
    %v579 = vpop.f32.mrb[0].mxu0
    %580 = vmatprep.mubr.f32.mxu0 0.0
    %581 = vmatmul.mubr.f32.gmra.mrb[0].mxu0 %v409
    %v582 = vpop.f32.mrb[0].mxu0
    %v583 = vadd.f32 %v449, %v582
    %v584 = vpop.f32.mrb[0].mxu0
    %585 = vmatprep.mubr.f32.mxu0 0.0
    %586 = vmatmul.mubr.f32.gmra.mrb[0].mxu0 %v410
    %v587 = vpop.f32.mrb[0].mxu0
    %v588 = vadd.f32 %v449, %v587
    %v589 = vpop.f32.mrb[0].mxu0
    %590 = vmatprep.mubr.f32.mxu0 0.0
    %591 = vmatmul.mubr.f32.gmra.mrb[0].mxu0 %v411
    %v592 = vpop.f32.mrb[0].mxu0
    %v593 = vadd.f32 %v449, %v592
    %v594 = vpop.f32.mrb[0].mxu0
    %595 = vmatprep.mubr.f32.mxu0 0.0
    %596 = vmatmul.mubr.f32.gmra.mrb[0].mxu0 %v412
    %v597 = vpop.f32.mrb[0].mxu0
    %v598 = vadd.f32 %v449, %v597
    %v599 = vpop.f32.mrb[0].mxu0
    %600 = vmatprep.mubr.f32.mxu0 0.0
    %601 = vmatmul.mubr.f32.gmra.mrb[0].mxu0 %v413
    %v602 = vpop.f32.mrb[0].mxu0
    %v603 = vadd.f32 %v449, %v602
    %v604 = vpop.f32.mrb[0].mxu0
    %605 = vmatprep.mubr.f32.mxu0 0.0
    %606 = vmatmul.mubr.f32.gmra.mrb[0].mxu0 %v414
    %v607 = vpop.f32.mrb[0].mxu0
    %v608 = vadd.f32 %v449, %v607
    %v609 = vpop.f32.mrb[0].mxu0
    %610 = vmatprep.mubr.f32.mxu0 0.0
    %611 = vmatmul.mubr.f32.gmra.mrb[0].mxu0 %v415
    %v612 = vpop.f32.mrb[0].mxu0
    %v613 = vadd.f32 %v449, %v612
    %v614 = vpop.f32.mrb[0].mxu0
    %615 = vmatprep.mubr.f32.mxu0 0.0
    %616 = vmatmul.mubr.f32.gmra.mrb[0].mxu0 %v416
    %v617 = vpop.f32.mrb[0].mxu0
    %v618 = vadd.f32 %v449, %v617
    %v619 = vpop.f32.mrb[0].mxu0
    %620 = vmatprep.mubr.f32.mxu0 0.0
    %621 = vmatmul.mubr.f32.gmra.mrb[0].mxu0 %v417
    %v622 = vpop.f32.mrb[0].mxu0
    %v623 = vadd.f32 %v449, %v622
    %v624 = vpop.f32.mrb[0].mxu0
    %625 = vmatprep.mubr.f32.mxu0 0.0
    %626 = vmatmul.mubr.f32.gmra.mrb[0].mxu0 %v418
    %v627 = vpop.f32.mrb[0].mxu0
    %v628 = vadd.f32 %v449, %v627
    %v629 = vpop.f32.mrb[0].mxu0
    %630 = vmatprep.mubr.f32.mxu0 0.0
    %631 = vmatmul.mubr.f32.gmra.mrb[0].mxu0 %v419
    %v632 = vpop.f32.mrb[0].mxu0
    %v633 = vadd.f32 %v449, %v632
    %v634 = vpop.f32.mrb[0].mxu0
    %635 = vmatprep.mubr.f32.mxu0 0.0
    %636 = vmatmul.mubr.f32.gmra.mrb[0].mxu0 %v420
    %v637 = vpop.f32.mrb[0].mxu0
    %v638 = vadd.f32 %v449, %v637
    %v639 = vpop.f32.mrb[0].mxu0
    %640 = vmatprep.mubr.f32.mxu0 0.0
    %641 = vmatmul.mubr.f32.gmra.mrb[0].mxu0 %v421
    %v642 = vpop.f32.mrb[0].mxu0
    %v643 = vadd.f32 %v449, %v642
    %v644 = vpop.f32.mrb[0].mxu0
    %645 = vmatprep.mubr.f32.mxu0 0.0
    %646 = vmatmul.mubr.f32.gmra.mrb[0].mxu0 %v422
    %v647 = vpop.f32.mrb[0].mxu0
    %v648 = vadd.f32 %v449, %v647
    %v649 = vpop.f32.mrb[0].mxu0
    %650 = vmatprep.mubr.f32.mxu0 0.0
    %651 = vmatmul.mubr.f32.gmra.mrb[0].mxu0 %v423
    %v652 = vpop.f32.mrb[0].mxu0
    %v653 = vadd.f32 %v449, %v652
    %v654 = vpop.f32.mrb[0].mxu0
    %655 = vmatprep.mubr.f32.mxu0 0.0
    %656 = vmatmul.mubr.f32.gmra.mrb[0].mxu0 %v424
    %v657 = vpop.f32.mrb[0].mxu0
    %v658 = vadd.f32 %v449, %v657
    %v659 = vpop.f32.mrb[0].mxu0
    %660 = vmatprep.mubr.f32.mxu0 0.0
    %661 = vmatmul.mubr.f32.gmra.mrb[0].mxu0 %v425
    %v662 = vpop.f32.mrb[0].mxu0
    %v663 = vadd.f32 %v449, %v662
    %v664 = vpop.f32.mrb[0].mxu0
    %665 = vmatprep.mubr.f32.mxu0 0.0
    %666 = vmatmul.mubr.f32.gmra.mrb[0].mxu0 %v426
    %v667 = vpop.f32.mrb[0].mxu0
    %v668 = vadd.f32 %v449, %v667
    %v669 = vpop.f32.mrb[0].mxu0
    %670 = vmatprep.mubr.f32.mxu0 0.0
    %671 = vmatmul.mubr.f32.gmra.mrb[0].mxu0 %v427
    %v672 = vpop.f32.mrb[0].mxu0
    %v673 = vadd.f32 %v449, %v672
    %v674 = vpop.f32.mrb[0].mxu0
    %675 = vdwg.mxu0
    %v676 = vmax.f32 %v518, 0.0
    %v677 = vmax.f32 %v523, 0.0
    %v678 = vmax.f32 %v528, 0.0
    %v679 = vmax.f32 %v533, 0.0
    %v680 = vmax.f32 %v538, 0.0
    %v681 = vmax.f32 %v543, 0.0
    %v682 = vmax.f32 %v548, 0.0
    %v683 = vmax.f32 %v553, 0.0
    %v684 = vmax.f32 %v558, 0.0
    %v685 = vmax.f32 %v563, 0.0
    %v686 = vmax.f32 %v568, 0.0
    %v687 = vmax.f32 %v573, 0.0
    %v688 = vmax.f32 %v578, 0.0
    %v689 = vmax.f32 %v583, 0.0
    %v690 = vmax.f32 %v588, 0.0
    %v691 = vmax.f32 %v593, 0.0
    %v692 = vmax.f32 %v598, 0.0
    %v693 = vmax.f32 %v603, 0.0
    %v694 = vmax.f32 %v608, 0.0
    %v695 = vmax.f32 %v613, 0.0
    %v696 = vmax.f32 %v618, 0.0
    %v697 = vmax.f32 %v623, 0.0
    %v698 = vmax.f32 %v628, 0.0
    %v699 = vmax.f32 %v633, 0.0
    %v700 = vmax.f32 %v638, 0.0
    %v701 = vmax.f32 %v643, 0.0
    %v702 = vmax.f32 %v648, 0.0
    %v703 = vmax.f32 %v653, 0.0
    %v704 = vmax.f32 %v658, 0.0
    %v705 = vmax.f32 %v663, 0.0
    %v706 = vmax.f32 %v668, 0.0
    %v707 = vmax.f32 %v673, 0.0
    %v708 = vld [vmem:[%s5] sm:$0xff]
    %v709 = vld [vmem:[%s5 + $0x8] sm:$0xff]
    %v710 = vld [vmem:[%s5 + $0x10] sm:$0xff]
    %v711 = vld [vmem:[%s5 + $0x18] sm:$0xff]
    %v712 = vld [vmem:[%s5 + $0x20] sm:$0xff]
    %v713 = vld [vmem:[%s5 + $0x28] sm:$0xff]
    %v714 = vld [vmem:[%s5 + $0x30] sm:$0xff]
    %v715 = vld [vmem:[%s5 + $0x38] sm:$0xff]
    %v716 = vld [vmem:[%s5 + $0x40] sm:$0xff]
    %v717 = vld [vmem:[%s5 + $0x48] sm:$0xff]
    %v718 = vld [vmem:[%s5 + $0x50] sm:$0xff]
    %v719 = vld [vmem:[%s5 + $0x58] sm:$0xff]
    %v720 = vld [vmem:[%s5 + $0x60] sm:$0xff]
    %v721 = vld [vmem:[%s5 + $0x68] sm:$0xff]
    %v722 = vld [vmem:[%s5 + $0x70] sm:$0xff]
    %v723 = vld [vmem:[%s5 + $0x78] sm:$0xff]
    %v724 = vld [vmem:[%s6] sm:$0x1]
    %v726 = vlaneseq
    %v727 = vshrl.u32 %v726, 7
    %v728 = vsub.s32 0, %v727
    %v729 = vrot.slane %v724, %v728
    %731 = vmatprep.subr.mxu0 0.0
    %732 = vmatpush1.msra.mxu0 %v708
    %733 = vmatprep.subr.mxu0 0.0
    %734 = vmatpush1.msra.mxu0 %v709
    %735 = vmatprep.subr.mxu0 0.0
    %736 = vmatpush1.msra.mxu0 %v710
    %737 = vmatprep.subr.mxu0 0.0
    %738 = vmatpush1.msra.mxu0 %v711
    %739 = vmatprep.subr.mxu0 0.0
    %740 = vmatpush1.msra.mxu0 %v712
    %741 = vmatprep.subr.mxu0 0.0
    %742 = vmatpush1.msra.mxu0 %v713
    %743 = vmatprep.subr.mxu0 0.0
    %744 = vmatpush1.msra.mxu0 %v714
    %745 = vmatprep.subr.mxu0 0.0
    %746 = vmatpush1.msra.mxu0 %v715
    %747 = vmatprep.subr.mxu0 0.0
    %748 = vmatpush1.msra.mxu0 %v716
    %749 = vmatprep.subr.mxu0 0.0
    %750 = vmatpush1.msra.mxu0 %v717
    %751 = vmatprep.subr.mxu0 0.0
    %752 = vmatpush1.msra.mxu0 %v718
    %753 = vmatprep.subr.mxu0 0.0
    %754 = vmatpush1.msra.mxu0 %v719
    %755 = vmatprep.subr.mxu0 0.0
    %756 = vmatpush1.msra.mxu0 %v720
    %757 = vmatprep.subr.mxu0 0.0
    %758 = vmatpush1.msra.mxu0 %v721
    %759 = vmatprep.subr.mxu0 0.0
    %760 = vmatpush1.msra.mxu0 %v722
    %761 = vmatprep.subr.mxu0 0.0
    %762 = vmatpush1.msra.mxu0 %v723
    %763 = vmatprep.subr.mxu0 0.0
    %764 = vmatpush1.msra.mxu0 0.0
    %765 = vmatprep.subr.mxu0 0.0
    %766 = vmatpush1.msra.mxu0 0.0
    %767 = vmatprep.subr.mxu0 0.0
    %768 = vmatpush1.msra.mxu0 0.0
    %769 = vmatprep.subr.mxu0 0.0
    %770 = vmatpush1.msra.mxu0 0.0
    %771 = vmatprep.subr.mxu0 0.0
    %772 = vmatpush1.msra.mxu0 0.0
    %773 = vmatprep.subr.mxu0 0.0
    %774 = vmatpush1.msra.mxu0 0.0
    %775 = vmatprep.subr.mxu0 0.0
    %776 = vmatpush1.msra.mxu0 0.0
    %777 = vmatprep.subr.mxu0 0.0
    %778 = vmatpush1.msra.mxu0 0.0
    %779 = vmatprep.subr.mxu0 0.0
    %780 = vmatpush1.msra.mxu0 0.0
    %781 = vmatprep.subr.mxu0 0.0
    %782 = vmatpush1.msra.mxu0 0.0
    %783 = vmatprep.subr.mxu0 0.0
    %784 = vmatpush1.msra.mxu0 0.0
    %785 = vmatprep.subr.mxu0 0.0
    %786 = vmatpush1.msra.mxu0 0.0
    %787 = vmatprep.subr.mxu0 0.0
    %788 = vmatpush1.msra.mxu0 0.0
    %789 = vmatprep.subr.mxu0 0.0
    %790 = vmatpush1.msra.mxu0 0.0
    %791 = vmatprep.subr.mxu0 0.0
    %792 = vmatpush1.msra.mxu0 0.0
    %793 = vmatprep.subr.mxu0 0.0
    %794 = vmatpush1.msra.mxu0 0.0
    %795 = vmatprep.mubr.f32.mxu0 0.0
    %796 = vmatmul.mubr.f32.gmra.mrb[0].mxu0 %v676
    %v797 = vpop.f32.mrb[0].mxu0
    %v798 = vadd.f32 %v729, %v797
    %v799 = vpop.f32.mrb[0].mxu0
    %800 = vmatprep.mubr.f32.mxu0 0.0
    %801 = vmatmul.mubr.f32.gmra.mrb[0].mxu0 %v677
    %v802 = vpop.f32.mrb[0].mxu0
    %v803 = vadd.f32 %v729, %v802
    %v804 = vpop.f32.mrb[0].mxu0
    %805 = vmatprep.mubr.f32.mxu0 0.0
    %806 = vmatmul.mubr.f32.gmra.mrb[0].mxu0 %v678
    %v807 = vpop.f32.mrb[0].mxu0
    %v808 = vadd.f32 %v729, %v807
    %v809 = vpop.f32.mrb[0].mxu0
    %810 = vmatprep.mubr.f32.mxu0 0.0
    %811 = vmatmul.mubr.f32.gmra.mrb[0].mxu0 %v679
    %v812 = vpop.f32.mrb[0].mxu0
    %v813 = vadd.f32 %v729, %v812
    %v814 = vpop.f32.mrb[0].mxu0
    %815 = vmatprep.mubr.f32.mxu0 0.0
    %816 = vmatmul.mubr.f32.gmra.mrb[0].mxu0 %v680
    %v817 = vpop.f32.mrb[0].mxu0
    %v818 = vadd.f32 %v729, %v817
    %v819 = vpop.f32.mrb[0].mxu0
    %820 = vmatprep.mubr.f32.mxu0 0.0
    %821 = vmatmul.mubr.f32.gmra.mrb[0].mxu0 %v681
    %v822 = vpop.f32.mrb[0].mxu0
    %v823 = vadd.f32 %v729, %v822
    %v824 = vpop.f32.mrb[0].mxu0
    %825 = vmatprep.mubr.f32.mxu0 0.0
    %826 = vmatmul.mubr.f32.gmra.mrb[0].mxu0 %v682
    %v827 = vpop.f32.mrb[0].mxu0
    %v828 = vadd.f32 %v729, %v827
    %v829 = vpop.f32.mrb[0].mxu0
    %830 = vmatprep.mubr.f32.mxu0 0.0
    %831 = vmatmul.mubr.f32.gmra.mrb[0].mxu0 %v683
    %v832 = vpop.f32.mrb[0].mxu0
    %v833 = vadd.f32 %v729, %v832
    %v834 = vpop.f32.mrb[0].mxu0
    %835 = vmatprep.mubr.f32.mxu0 0.0
    %836 = vmatmul.mubr.f32.gmra.mrb[0].mxu0 %v684
    %v837 = vpop.f32.mrb[0].mxu0
    %v838 = vadd.f32 %v729, %v837
    %v839 = vpop.f32.mrb[0].mxu0
    %840 = vmatprep.mubr.f32.mxu0 0.0
    %841 = vmatmul.mubr.f32.gmra.mrb[0].mxu0 %v685
    %v842 = vpop.f32.mrb[0].mxu0
    %v843 = vadd.f32 %v729, %v842
    %v844 = vpop.f32.mrb[0].mxu0
    %845 = vmatprep.mubr.f32.mxu0 0.0
    %846 = vmatmul.mubr.f32.gmra.mrb[0].mxu0 %v686
    %v847 = vpop.f32.mrb[0].mxu0
    %v848 = vadd.f32 %v729, %v847
    %v849 = vpop.f32.mrb[0].mxu0
    %850 = vmatprep.mubr.f32.mxu0 0.0
    %851 = vmatmul.mubr.f32.gmra.mrb[0].mxu0 %v687
    %v852 = vpop.f32.mrb[0].mxu0
    %v853 = vadd.f32 %v729, %v852
    %v854 = vpop.f32.mrb[0].mxu0
    %855 = vmatprep.mubr.f32.mxu0 0.0
    %856 = vmatmul.mubr.f32.gmra.mrb[0].mxu0 %v688
    %v857 = vpop.f32.mrb[0].mxu0
    %v858 = vadd.f32 %v729, %v857
    %v859 = vpop.f32.mrb[0].mxu0
    %860 = vmatprep.mubr.f32.mxu0 0.0
    %861 = vmatmul.mubr.f32.gmra.mrb[0].mxu0 %v689
    %v862 = vpop.f32.mrb[0].mxu0
    %v863 = vadd.f32 %v729, %v862
    %v864 = vpop.f32.mrb[0].mxu0
    %865 = vmatprep.mubr.f32.mxu0 0.0
    %866 = vmatmul.mubr.f32.gmra.mrb[0].mxu0 %v690
    %v867 = vpop.f32.mrb[0].mxu0
    %v868 = vadd.f32 %v729, %v867
    %v869 = vpop.f32.mrb[0].mxu0
    %870 = vmatprep.mubr.f32.mxu0 0.0
    %871 = vmatmul.mubr.f32.gmra.mrb[0].mxu0 %v691
    %v872 = vpop.f32.mrb[0].mxu0
    %v873 = vadd.f32 %v729, %v872
    %v874 = vpop.f32.mrb[0].mxu0
    %875 = vmatprep.mubr.f32.mxu0 0.0
    %876 = vmatmul.mubr.f32.gmra.mrb[0].mxu0 %v692
    %v877 = vpop.f32.mrb[0].mxu0
    %v878 = vadd.f32 %v729, %v877
    %v879 = vpop.f32.mrb[0].mxu0
    %880 = vmatprep.mubr.f32.mxu0 0.0
    %881 = vmatmul.mubr.f32.gmra.mrb[0].mxu0 %v693
    %v882 = vpop.f32.mrb[0].mxu0
    %v883 = vadd.f32 %v729, %v882
    %v884 = vpop.f32.mrb[0].mxu0
    %885 = vmatprep.mubr.f32.mxu0 0.0
    %886 = vmatmul.mubr.f32.gmra.mrb[0].mxu0 %v694
    %v887 = vpop.f32.mrb[0].mxu0
    %v888 = vadd.f32 %v729, %v887
    %v889 = vpop.f32.mrb[0].mxu0
    %890 = vmatprep.mubr.f32.mxu0 0.0
    %891 = vmatmul.mubr.f32.gmra.mrb[0].mxu0 %v695
    %v892 = vpop.f32.mrb[0].mxu0
    %v893 = vadd.f32 %v729, %v892
    %v894 = vpop.f32.mrb[0].mxu0
    %895 = vmatprep.mubr.f32.mxu0 0.0
    %896 = vmatmul.mubr.f32.gmra.mrb[0].mxu0 %v696
    %v897 = vpop.f32.mrb[0].mxu0
    %v898 = vadd.f32 %v729, %v897
    %v899 = vpop.f32.mrb[0].mxu0
    %900 = vmatprep.mubr.f32.mxu0 0.0
    %901 = vmatmul.mubr.f32.gmra.mrb[0].mxu0 %v697
    %v902 = vpop.f32.mrb[0].mxu0
    %v903 = vadd.f32 %v729, %v902
    %v904 = vpop.f32.mrb[0].mxu0
    %905 = vmatprep.mubr.f32.mxu0 0.0
    %906 = vmatmul.mubr.f32.gmra.mrb[0].mxu0 %v698
    %v907 = vpop.f32.mrb[0].mxu0
    %v908 = vadd.f32 %v729, %v907
    %v909 = vpop.f32.mrb[0].mxu0
    %910 = vmatprep.mubr.f32.mxu0 0.0
    %911 = vmatmul.mubr.f32.gmra.mrb[0].mxu0 %v699
    %v912 = vpop.f32.mrb[0].mxu0
    %v913 = vadd.f32 %v729, %v912
    %v914 = vpop.f32.mrb[0].mxu0
    %915 = vmatprep.mubr.f32.mxu0 0.0
    %916 = vmatmul.mubr.f32.gmra.mrb[0].mxu0 %v700
    %v917 = vpop.f32.mrb[0].mxu0
    %v918 = vadd.f32 %v729, %v917
    %v919 = vpop.f32.mrb[0].mxu0
    %920 = vmatprep.mubr.f32.mxu0 0.0
    %921 = vmatmul.mubr.f32.gmra.mrb[0].mxu0 %v701
    %v922 = vpop.f32.mrb[0].mxu0
    %v923 = vadd.f32 %v729, %v922
    %v924 = vpop.f32.mrb[0].mxu0
    %925 = vmatprep.mubr.f32.mxu0 0.0
    %926 = vmatmul.mubr.f32.gmra.mrb[0].mxu0 %v702
    %v927 = vpop.f32.mrb[0].mxu0
    %v928 = vadd.f32 %v729, %v927
    %v929 = vpop.f32.mrb[0].mxu0
    %930 = vmatprep.mubr.f32.mxu0 0.0
    %931 = vmatmul.mubr.f32.gmra.mrb[0].mxu0 %v703
    %v932 = vpop.f32.mrb[0].mxu0
    %v933 = vadd.f32 %v729, %v932
    %v934 = vpop.f32.mrb[0].mxu0
    %935 = vmatprep.mubr.f32.mxu0 0.0
    %936 = vmatmul.mubr.f32.gmra.mrb[0].mxu0 %v704
    %v937 = vpop.f32.mrb[0].mxu0
    %v938 = vadd.f32 %v729, %v937
    %v939 = vpop.f32.mrb[0].mxu0
    %940 = vmatprep.mubr.f32.mxu0 0.0
    %941 = vmatmul.mubr.f32.gmra.mrb[0].mxu0 %v705
    %v942 = vpop.f32.mrb[0].mxu0
    %v943 = vadd.f32 %v729, %v942
    %v944 = vpop.f32.mrb[0].mxu0
    %945 = vmatprep.mubr.f32.mxu0 0.0
    %946 = vmatmul.mubr.f32.gmra.mrb[0].mxu0 %v706
    %v947 = vpop.f32.mrb[0].mxu0
    %v948 = vadd.f32 %v729, %v947
    %v949 = vpop.f32.mrb[0].mxu0
    %950 = vmatprep.mubr.f32.mxu0 0.0
    %951 = vmatmul.mubr.f32.gmra.mrb[0].mxu0 %v707
    %v952 = vpop.f32.mrb[0].mxu0
    %v953 = vadd.f32 %v729, %v952
    %v954 = vpop.f32.mrb[0].mxu0
    %955 = vdwg.mxu0
    %956 = vst [vmem:[#allocation2] sm:$0xff] %v798
    %957 = vst [vmem:[#allocation2 + $0x8] sm:$0xff] %v803
    %958 = vst [vmem:[#allocation2 + $0x10] sm:$0xff] %v808
    %959 = vst [vmem:[#allocation2 + $0x18] sm:$0xff] %v813
    %960 = vst [vmem:[#allocation2 + $0x20] sm:$0xff] %v818
    %961 = vst [vmem:[#allocation2 + $0x28] sm:$0xff] %v823
    %962 = vst [vmem:[#allocation2 + $0x30] sm:$0xff] %v828
    %963 = vst [vmem:[#allocation2 + $0x38] sm:$0xff] %v833
    %964 = vst [vmem:[#allocation2 + $0x40] sm:$0xff] %v838
    %965 = vst [vmem:[#allocation2 + $0x48] sm:$0xff] %v843
    %966 = vst [vmem:[#allocation2 + $0x50] sm:$0xff] %v848
    %967 = vst [vmem:[#allocation2 + $0x58] sm:$0xff] %v853
    %968 = vst [vmem:[#allocation2 + $0x60] sm:$0xff] %v858
    %969 = vst [vmem:[#allocation2 + $0x68] sm:$0xff] %v863
    %970 = vst [vmem:[#allocation2 + $0x70] sm:$0xff] %v868
    %971 = vst [vmem:[#allocation2 + $0x78] sm:$0xff] %v873
    %972 = vst [vmem:[#allocation2 + $0x80] sm:$0xff] %v878
    %973 = vst [vmem:[#allocation2 + $0x88] sm:$0xff] %v883
    %974 = vst [vmem:[#allocation2 + $0x90] sm:$0xff] %v888
    %975 = vst [vmem:[#allocation2 + $0x98] sm:$0xff] %v893
    %976 = vst [vmem:[#allocation2 + $0xa0] sm:$0xff] %v898
    %977 = vst [vmem:[#allocation2 + $0xa8] sm:$0xff] %v903
    %978 = vst [vmem:[#allocation2 + $0xb0] sm:$0xff] %v908
    %979 = vst [vmem:[#allocation2 + $0xb8] sm:$0xff] %v913
    %980 = vst [vmem:[#allocation2 + $0xc0] sm:$0xff] %v918
    %981 = vst [vmem:[#allocation2 + $0xc8] sm:$0xff] %v923
    %982 = vst [vmem:[#allocation2 + $0xd0] sm:$0xff] %v928
    %983 = vst [vmem:[#allocation2 + $0xd8] sm:$0xff] %v933
    %984 = vst [vmem:[#allocation2 + $0xe0] sm:$0xff] %v938
    %985 = vst [vmem:[#allocation2 + $0xe8] sm:$0xff] %v943
    %986 = vst [vmem:[#allocation2 + $0xf0] sm:$0xff] %v948
    %987 = vst [vmem:[#allocation2 + $0xf8] sm:$0xff] %v953
    // Predicated region
    $region30: #{tpu_custom_call.1} parent=1 // pred_check
      _
    $region31: #{tpu_custom_call.1} parent=1 // pred_check_branch
      %989 = sbr.rel (0) target = $region33
    $region32: #{tpu_custom_call.1} parent=1 // pred_region
      %s991 = ssub.s32 4096, 4096
      %992 = vsyncadd [#allocation3], %s991
      %s993 = sshll.u32 [#allocation2], 4
      %s994 = int_to_ptr.vmem [resolvable:$true] %s993
      %999 = dma.vmem_to_hbm [thread:$0]  %s994, 4096, %s7, [#allocation3], 128, 128, 8
    $region33: #{tpu_custom_call.1} parent=1 // pred_fallthru
      _
    // Predicated region
    $region34: #{tpu_custom_call.1} parent=1 // pred_check
      _
    $region35: #{tpu_custom_call.1} parent=1 // pred_check_branch
      %1001 = sbr.rel (0) target = $region37
    $region36: #{tpu_custom_call.1} parent=1 // pred_region
      %1002 = dma.done [#allocation3], 4096
    $region37: #{tpu_custom_call.1} parent=1 // pred_fallthru
      _
    %1003 = vsyncpa [#allocation3], 1

</llo_original>
